<compile_context>
chip_gen: v7x
topology: tpu7x:2x2x1
jax: 0.10.0
libtpu: 0.0.40
codegen_flags: <defaults>
</compile_context>

<pallas_src>
import jax
import jax.numpy as jnp
from jax.experimental import pallas as pl
from jax.experimental.pallas import tpu as pltpu


# ----------------------------- kernels --------------------------------------

def _add_pe_kernel(x_ref, pe_ref, o_ref):
    # x_ref: (tB, tL) lane-dense block; pe_ref: (1, tL) broadcast over rows.
    o_ref[...] = (x_ref[...] + pe_ref[...]).astype(o_ref.dtype)


def _add_pe_dropout_kernel(x_ref, pe_ref, m_ref, o_ref):
    # m_ref already folds keep-mask and 1/(1-p) scale into a single multiplier.
    o_ref[...] = ((x_ref[...] + pe_ref[...]) * m_ref[...]).astype(o_ref.dtype)


# ----------------------------- wrapper ---------------------------------------

def _pick_tile(n, unit, cap):
    """Largest multiple of `unit` that divides n and is <= cap; else n (full dim)."""
    if n <= cap:
        return n
    if n % unit:
        return n                      # fall back to full dim (always legal)
    t = (cap // unit) * unit
    while t >= unit:
        if n % t == 0:
            return t
        t -= unit
    return n


def learned_positional_embedding_1d(x, pe, offset=0, *, dropout_p=0.1,
                                    training=False, seed=0):
    """x: (B, T, D); pe: (1, num_inputs, D).  Returns (B, T, D)."""
    B, T, D = x.shape
    L = T * D

    # Glue: slice the tiny pe table to the current window, flatten (T, D) -> L.
    pe_slice = jax.lax.dynamic_slice(pe, (0, offset, 0), (1, T, D)).astype(x.dtype)
    x2 = x.reshape(B, L)              # contiguous -> free reshape, lane-dense
    pe2 = pe_slice.reshape(1, L)

    tB = _pick_tile(B, 8, 512)        # row tile (sublane axis)
    tL = _pick_tile(L, 128, 1024)     # lane tile (multiple of 128 when possible)
    grid = (B // tB, L // tL)         # tiles divide evenly by construction

    x_spec = pl.BlockSpec((tB, tL), lambda i, j: (i, j))
    pe_spec = pl.BlockSpec((1, tL), lambda i, j: (0, j))
    out_spec = pl.BlockSpec((tB, tL), lambda i, j: (i, j))
    cparams = pltpu.CompilerParams(dimension_semantics=("parallel", "parallel"))

    if training and dropout_p > 0.0:
        # TODO(synk): on real TPU the keep-mask could be generated in-kernel via
        # pltpu.prng_seed/prng_random_bits (saving the mask's HBM traffic); it is
        # built wrapper-side here since interpret/CPU mode has no TPU PRNG lowering.
        keep = jax.random.bernoulli(jax.random.PRNGKey(seed), 1.0 - dropout_p, (B, L))
        mult = keep.astype(x.dtype) * jnp.asarray(1.0 / (1.0 - dropout_p), x.dtype)
        out2 = pl.pallas_call(
            _add_pe_dropout_kernel,
            out_shape=jax.ShapeDtypeStruct((B, L), x.dtype),
            grid=grid,
            in_specs=[x_spec, pe_spec,
                      pl.BlockSpec((tB, tL), lambda i, j: (i, j))],
            out_specs=out_spec,
            compiler_params=cparams,
        )(x2, pe2, mult)
    else:
        out2 = pl.pallas_call(
            _add_pe_kernel,
            out_shape=jax.ShapeDtypeStruct((B, L), x.dtype),
            grid=grid,
            in_specs=[x_spec, pe_spec],
            out_specs=out_spec,
            compiler_params=cparams,
        )(x2, pe2)

    return out2.reshape(B, T, D)


# ------------------------------- demo ----------------------------------------

if __name__ == "__main__":
    # Module config: num_inputs=16 positions, input_size (d_model)=32, dropout=0.1
    num_inputs, d_model = 16, 32
    B, T = 2, 8
    offset = 3

    key = jax.random.PRNGKey(0)
    k_pe, k_x = jax.random.split(key)

    # Deterministic parameter init: trunc_normal_ (std=1, clipped to [-2, 2])
    pe = jax.random.truncated_normal(
        k_pe, -2.0, 2.0, (1, num_inputs, d_model)).astype(jnp.float32)
    x = jax.random.normal(k_x, (B, T, d_model), dtype=jnp.float32)

    # Eval-mode forward (dropout is identity), matching module.eval() semantics.
    out = learned_positional_embedding_1d(x, pe, offset=offset,
                                          dropout_p=0.1, training=False)
    out = jax.block_until_ready(out)

    ref = x + pe[:, offset:offset + T]
    assert out.shape == (B, T, d_model)
    assert jnp.allclose(out, ref, atol=1e-6), "mismatch vs reference add"

    # Training-mode path: each element is either 0 (dropped) or (x+pe)/(1-p).
    p = 0.1
    out_tr = learned_positional_embedding_1d(x, pe, offset=offset,
                                             dropout_p=p, training=True, seed=42)
    out_tr = jax.block_until_ready(out_tr)
    scaled_ref = ref * jnp.asarray(1.0 / (1.0 - p), out_tr.dtype)
    ok = jnp.isclose(out_tr, 0.0, atol=1e-6) | jnp.isclose(out_tr, scaled_ref,
                                                           rtol=1e-4, atol=1e-5)
    assert bool(jnp.all(ok)), "dropout output not in {0, (x+pe)/(1-p)}"

    print("KERNEL_OK")
</pallas_src>

<mosaic_0001>
module attributes {stable_mosaic.version = 11 : i64} {
  func.func @_add_pe_kernel(%arg0: i32, %arg1: i32, %arg2: memref<2x256xf32, #tpu.memory_space<vmem>>, %arg3: memref<1x256xf32, #tpu.memory_space<vmem>>, %arg4: memref<2x256xf32, #tpu.memory_space<vmem>>) attributes {dimension_semantics = [#tpu.dimension_semantics<parallel>, #tpu.dimension_semantics<parallel>], iteration_bounds = array<i64: 1, 1>, scalar_prefetch = 0 : i64, scratch_operands = 0 : i64, tpu.core_type = #tpu.core_type<tc>, window_params = [{transform_indices = @transform_0, window_bounds = array<i64: 2, 256>}, {transform_indices = @transform_1, window_bounds = array<i64: 1, 256>}, {transform_indices = @transform_2, window_bounds = array<i64: 2, 256>}]} {
    %c0 = arith.constant 0 : index
    %c0_0 = arith.constant 0 : index
    %0 = vector.load %arg2[%c0, %c0_0] : memref<2x256xf32, #tpu.memory_space<vmem>>, vector<2x256xf32>
    %c0_1 = arith.constant 0 : index
    %c0_2 = arith.constant 0 : index
    %1 = vector.load %arg3[%c0_1, %c0_2] : memref<1x256xf32, #tpu.memory_space<vmem>>, vector<1x256xf32>
    %2 = vector.broadcast %1 : vector<1x256xf32> to vector<2x256xf32>
    %3 = arith.addf %0, %2 : vector<2x256xf32>
    %c0_3 = arith.constant 0 : index
    %c0_4 = arith.constant 0 : index
    %4 = vector.load %arg4[%c0_3, %c0_4] : memref<2x256xf32, #tpu.memory_space<vmem>>, vector<2x256xf32>
    tpu.vector_store %arg4[%c0_3, %c0_4], %3 {strides = array<i32>} : memref<2x256xf32, #tpu.memory_space<vmem>>, vector<2x256xf32>,
    return
  }
  func.func @transform_0(%arg0: i32, %arg1: i32) -> (i32, i32) {
    %c0_i32 = arith.constant 0 : i32
    return %arg0, %arg1 : i32, i32
  }
  func.func @transform_1(%arg0: i32, %arg1: i32) -> (i32, i32) {
    %c0_i32 = arith.constant 0 : i32
    %c0_i32_0 = arith.constant 0 : i32
    return %c0_i32, %arg1 : i32, i32
  }
  func.func @transform_2(%arg0: i32, %arg1: i32) -> (i32, i32) {
    %c0_i32 = arith.constant 0 : i32
    return %arg0, %arg1 : i32, i32
  }
}

</mosaic_0001>

<llo_original>
// kernel: tpu_custom_call.1
$region0: #{tpu_custom_call.1}
  #allocation0 [shape = 'u32[]', space=smem, size = 0x4, offset = 0x4, fixed_abs, tag = 'smem constant byte address 0x4 - core index']
  #allocation1 [shape = 'u32[144,128]{1,0:T(1,128)}', space=vmem, size = 0x12000, scoped, tag = 'internal scratch']
  %s0 = inlined_call_operand.hbm [shape: f32[2,256], index: 0, kind: input, shape index: {}]
  %s1 = inlined_call_operand.vmem [shape: f32[1,256], index: 1, kind: input, shape index: {}]
  %s2 = inlined_call_operand.hbm [shape: f32[2,256], index: 2, kind: output, shape index: {}]
  %s3 = sld [smem:[#allocation0]]
  $region22: #{tpu_custom_call.1} parent=0
    _
  %s5 = ssub.s32 1, %s3
  %s6 = scalar_select 0, %s5, %s3
  $region1: #{tpu_custom_call.1} parent=0
    #allocation2 [shape = 'u8[2048]{0}', space=vmem, size = 0x800, scoped, tag = 'input window, operand 0, single buffered']
    #allocation3 [shape = 's32[1]{0}', space=sflag, size = 0x4, scoped, tag = 'scoped memory for tpu_custom_call.1']
    #allocation4 [shape = 's32[1]{0}', space=sflag, size = 0x4, scoped, tag = 'scoped memory for tpu_custom_call.1']
    #allocation5 [shape = 'u8[2048]{0}', space=vmem, size = 0x800, scoped, tag = 'output window, operand 0, single buffered']
    %7 = vsyncpa [#allocation3], 0
    %8 = vsyncpa [#allocation4], 0
    // Predicated region
    $region2: #{tpu_custom_call.1} parent=1 // pred_check
      _
    $region3: #{tpu_custom_call.1} parent=1 // pred_check_branch
      %10 = sbr.rel (0) target = $region5
    $region4: #{tpu_custom_call.1} parent=1 // pred_region
      %s12 = ssub.s32 64, 64
      %13 = vsyncadd [#allocation3], %s12
      %s15 = sshll.u32 [#allocation2], 4
      %s16 = int_to_ptr.vmem [resolvable:$true] %s15
      %18 = dma.hbm_to_vmem [thread:$0]  %s0, 64, %s16, [#allocation3]
    $region5: #{tpu_custom_call.1} parent=1 // pred_fallthru
      _
    // Predicated region
    $region6: #{tpu_custom_call.1} parent=1 // pred_check
      _
    $region7: #{tpu_custom_call.1} parent=1 // pred_check_branch
      %20 = sbr.rel (0) target = $region9
    $region8: #{tpu_custom_call.1} parent=1 // pred_region
      _
    $region9: #{tpu_custom_call.1} parent=1 // pred_fallthru
      _
    // Predicated region
    $region10: #{tpu_custom_call.1} parent=1 // pred_check
      _
    $region11: #{tpu_custom_call.1} parent=1 // pred_check_branch
      %22 = sbr.rel (0) target = $region13
    $region12: #{tpu_custom_call.1} parent=1 // pred_region
      %23 = dma.done [#allocation3], 64
    $region13: #{tpu_custom_call.1} parent=1 // pred_fallthru
      _
    %v24 = vld [vmem:[#allocation2] sm:$0xf]
    %v25 = vld [vmem:[%s1] sm:$0x3]
    %v27 = vlaneseq
    %v28 = vshrl.u32 %v27, 7
    %v29 = vsub.s32 0, %v28
    %v30 = vrot.slane %v25, %v29
    %v31 = vlaneseq
    %v32 = vshrl.u32 %v31, 7
    %v33 = vsub.s32 1, %v32
    %v34 = vrot.slane %v25, %v33
    %v35 = vcombine.low %v30, %v34
    %v37 = vunpack.c.l.s4 1983009808
    %v38 = vunpack.c.0.s8 %v37
    %v39 = vlaneseq
    %v40 = vshrl.u32 %v39, 7
    %v41 = vsub.s32 %v38, %v40
    %v42 = vrot.slane %v35, %v41
    %v44 = vadd.f32 %v24, %v42
    %45 = vst [vmem:[#allocation5] sm:$0xf] %v44
    // Predicated region
    $region14: #{tpu_custom_call.1} parent=1 // pred_check
      _
    $region15: #{tpu_custom_call.1} parent=1 // pred_check_branch
      %47 = sbr.rel (0) target = $region17
    $region16: #{tpu_custom_call.1} parent=1 // pred_region
      %s49 = ssub.s32 64, 64
      %50 = vsyncadd [#allocation4], %s49
      %s52 = sshll.u32 [#allocation5], 4
      %s53 = int_to_ptr.vmem [resolvable:$true] %s52
      %55 = dma.vmem_to_hbm [thread:$0]  %s53, 64, %s2, [#allocation4]
    $region17: #{tpu_custom_call.1} parent=1 // pred_fallthru
      _
    // Predicated region
    $region18: #{tpu_custom_call.1} parent=1 // pred_check
      _
    $region19: #{tpu_custom_call.1} parent=1 // pred_check_branch
      %57 = sbr.rel (0) target = $region21
    $region20: #{tpu_custom_call.1} parent=1 // pred_region
      %58 = dma.done [#allocation4], 64
    $region21: #{tpu_custom_call.1} parent=1 // pred_fallthru
      _
    %59 = vsyncpa [#allocation3], 1
    %60 = vsyncpa [#allocation4], 1

</llo_original>
